<compile_context>
chip_gen: v7x
topology: tpu7x:2x2x1
jax: 0.10.0
libtpu: 0.0.40
codegen_flags: <defaults>
</compile_context>

<pallas_src>
from functools import lru_cache

import numpy as np
import jax
import jax.numpy as jnp
from jax.experimental import pallas as pl
from jax.experimental.pallas import tpu as pltpu


# ----------------------------- host-side operators --------------------------

def adaptive_avg_pool_matrix(out_size: int, in_size: int) -> np.ndarray:
    """1-D operator reproducing torch AdaptiveAvgPool region arithmetic."""
    P = np.zeros((out_size, in_size), dtype=np.float32)
    for i in range(out_size):
        start = (i * in_size) // out_size
        end = -((-(i + 1) * in_size) // out_size)  # ceil((i+1)*in/out)
        P[i, start:end] = 1.0 / float(end - start)
    return P


def bilinear_upsample_matrix(out_size: int, in_size: int) -> np.ndarray:
    """1-D operator reproducing F.interpolate(mode='bilinear', align_corners=True)."""
    U = np.zeros((out_size, in_size), dtype=np.float32)
    if in_size == 1:
        U[:, 0] = 1.0
        return U
    if out_size == 1:   # align_corners: single output sample maps to src index 0
        U[0, 0] = 1.0
        return U
    scale = (in_size - 1) / (out_size - 1)
    for h in range(out_size):
        src = h * scale
        h0 = min(int(np.floor(src)), in_size - 1)
        h1 = min(h0 + 1, in_size - 1)
        frac = src - h0
        U[h, h0] += 1.0 - frac
        U[h, h1] += frac
    return U


@lru_cache(maxsize=None)
def _ppm_operators(H: int, W: int, bins: tuple, cred: int):
    """Build (and cache) the stacked pooling / upsample operators and the
    block-diagonal branch mask for a given spatial size + bin config."""
    p_rows, u_rows = [], []
    for bn in bins:
        Ph = adaptive_avg_pool_matrix(bn, H)
        Pw = adaptive_avg_pool_matrix(bn, W)
        Uh = bilinear_upsample_matrix(H, bn)
        Uw = bilinear_upsample_matrix(W, bn)
        p_rows.append(np.kron(Ph, Pw))          # (bn*bn, H*W)
        u_rows.append(np.kron(Uh, Uw).T)        # (bn*bn, H*W)   == U2^T
    P2_all = np.concatenate(p_rows, axis=0)     # (BB, HW)
    U2T_all = np.concatenate(u_rows, axis=0)    # (BB, HW)
    BB = P2_all.shape[0]

    BC = len(bins) * cred
    mask = np.zeros((BC, BB), dtype=np.float32)
    off = 0
    for bi, bn in enumerate(bins):
        bb = bn * bn
        mask[bi * cred:(bi + 1) * cred, off:off + bb] = 1.0
        off += bb
    # P2^T so the kernel does x(Cin,HW) @ P2T(HW,BB) directly.
    return np.ascontiguousarray(P2_all.T), U2T_all, mask


def _pick_cin_tile(cin: int, max_tile: int = 512) -> int:
    """Largest Cin tile <= max_tile that divides Cin and is a multiple of 128
    (so the (BC, tile_c) weight block keeps a legal lane-dim)."""
    if cin <= max_tile:
        return cin
    for t in range(max_tile, 127, -128):
        if cin % t == 0:
            return t
    return cin


# ------------------------------ Pallas kernel -------------------------------

def ppm_fused_kernel(x_ref, p2t_ref, w_ref, b_ref, m_ref, u2t_ref, o_ref, z_acc):
    # x_ref:   (1, Ct, HW)  one Cin-tile of one batch element (channels-first)
    # p2t_ref: (HW, BB)     stacked adaptive-avg-pool operators, transposed
    # w_ref:   (BC, Ct)     stacked BN-folded 1x1 conv weights (this Cin tile)
    # b_ref:   (BC, 1)      stacked BN bias (f32)
    # m_ref:   (BC, BB)     block-diagonal branch mask (f32)
    # u2t_ref: (BB, HW)     stacked align_corners bilinear upsample ops, transposed
    # o_ref:   (1, BC, HW)  all branches' outputs for this batch element
    # z_acc:   (BC, BB)     f32 accumulator across Cin tiles
    c = pl.program_id(1)

    @pl.when(c == 0)
    def _():
        z_acc[...] = jnp.zeros_like(z_acc)

    xb = x_ref[0]                                                      # (Ct, HW)
    pooled = jnp.dot(xb, p2t_ref[...],
                     preferred_element_type=jnp.float32)               # (Ct, BB)
    z_acc[...] += jnp.dot(w_ref[...], pooled.astype(w_ref.dtype),
                          preferred_element_type=jnp.float32)          # (BC, BB)

    @pl.when(c == pl.num_programs(1) - 1)
    def _():
        # BN bias + ReLU (f32 epilogue), then kill cross-branch blocks.
        z = jnp.maximum(z_acc[...] + b_ref[...], 0.0) * m_ref[...]     # (BC, BB)
        o_ref[0] = jnp.dot(z.astype(u2t_ref.dtype), u2t_ref[...],
                           preferred_element_type=jnp.float32
                           ).astype(o_ref.dtype)                       # (BC, HW)


def ppm_branches_fused(x_chw, P2T, W_stack, b_stack, mask, U2T):
    """All pyramid branches for all batch elements in one pallas_call.

    x_chw:   (N, Cin, HW)
    P2T:     (HW, BB)
    W_stack: (BC, Cin)   BC = num_branches * reduction_dim
    b_stack: (BC, 1)
    mask:    (BC, BB)
    U2T:     (BB, HW)
    returns  (N, BC, HW) float32
    """
    N, Cin, HW = x_chw.shape
    BB = P2T.shape[1]
    BC = W_stack.shape[0]
    tile_c = _pick_cin_tile(Cin)
    n_ct = Cin // tile_c

    return pl.pallas_call(
        ppm_fused_kernel,
        out_shape=jax.ShapeDtypeStruct((N, BC, HW), jnp.float32),
        grid=(N, n_ct),
        in_specs=[
            pl.BlockSpec((1, tile_c, HW), lambda n, c: (n, c, 0)),
            pl.BlockSpec((HW, BB), lambda n, c: (0, 0)),
            pl.BlockSpec((BC, tile_c), lambda n, c: (0, c)),
            pl.BlockSpec((BC, 1), lambda n, c: (0, 0)),
            pl.BlockSpec((BC, BB), lambda n, c: (0, 0)),
            pl.BlockSpec((BB, HW), lambda n, c: (0, 0)),
        ],
        out_specs=pl.BlockSpec((1, BC, HW), lambda n, c: (n, 0, 0)),
        scratch_shapes=[pltpu.VMEM((BC, BB), jnp.float32)],
        compiler_params=pltpu.CompilerParams(
            dimension_semantics=("parallel", "arbitrary"),
            vmem_limit_bytes=64 * 1024 * 1024,
        ),
    )(x_chw, P2T, W_stack, b_stack, mask, U2T)


# ------------------------------ PPM forward ---------------------------------

def ppm_forward(x_nchw, params, bins, compute_dtype=jnp.float32):
    """x_nchw: (N, Cin, H, W) float32. Returns (N, Cin + len(bins)*Cred, H, W).

    compute_dtype: dtype of the matmul operands (x, P2, W, U2). Use
    jnp.bfloat16 to halve HBM/VMEM traffic (f32 accumulation is kept);
    default float32 matches the PyTorch reference exactly.
    """
    N, Cin, H, W = x_nchw.shape
    HW = H * W
    Cred = params[0][0].shape[1]
    BC = len(bins) * Cred

    P2T_np, U2T_np, mask_np = _ppm_operators(H, W, tuple(bins), Cred)

    # Channels-first, spatially flattened view: free reshape, no transpose.
    x_chw = x_nchw.reshape(N, Cin, HW).astype(compute_dtype)
    P2T = jnp.asarray(P2T_np, compute_dtype)                 # (HW, BB)
    U2T = jnp.asarray(U2T_np, compute_dtype)                 # (BB, HW)
    mask = jnp.asarray(mask_np, jnp.float32)                 # (BC, BB)
    W_stack = jnp.concatenate([w.T for (w, _) in params], axis=0
                              ).astype(compute_dtype)        # (BC, Cin)
    b_stack = jnp.concatenate([b.reshape(-1, 1) for (_, b) in params], axis=0
                              ).astype(jnp.float32)          # (BC, 1)

    y = ppm_branches_fused(x_chw, P2T, W_stack, b_stack, mask, U2T)  # (N, BC, HW)
    y_nchw = y.reshape(N, BC, H, W)
    return jnp.concatenate([x_nchw, y_nchw], axis=1)


def make_params(key, in_dim, reduction_dim, bins, eps=1e-5):
    """Deterministic synthetic Conv2d(1x1, no bias) + eval-mode BatchNorm2d params,
    folded into an effective (Cin, Cred) weight + (1, Cred) bias per branch."""
    params = []
    for _ in bins:
        key, kw, kg, kb, km, kv = jax.random.split(key, 6)
        conv_w = 0.1 * jax.random.normal(kw, (reduction_dim, in_dim), jnp.float32)
        gamma = 1.0 + 0.1 * jax.random.normal(kg, (reduction_dim,), jnp.float32)
        beta = 0.1 * jax.random.normal(kb, (reduction_dim,), jnp.float32)
        run_mean = 0.1 * jax.random.normal(km, (reduction_dim,), jnp.float32)
        run_var = 0.5 + jnp.abs(jax.random.normal(kv, (reduction_dim,), jnp.float32))
        scale = gamma / jnp.sqrt(run_var + eps)             # (Cred,)
        W_eff = conv_w.T * scale[None, :]                   # (Cin, Cred)
        b_eff = (beta - run_mean * scale)[None, :]          # (1, Cred)
        params.append((W_eff, b_eff))
    return params


# ----------------------------- pure-JAX reference ---------------------------

def ppm_reference(x_nchw, params, bins):
    """Straightforward (non-fused, separable) implementation for validation."""
    N, Cin, H, W = x_nchw.shape
    outs = [x_nchw]
    for bn, (W_eff, b_eff) in zip(bins, params):
        Ph = jnp.asarray(adaptive_avg_pool_matrix(bn, H))
        Pw = jnp.asarray(adaptive_avg_pool_matrix(bn, W))
        Uh = jnp.asarray(bilinear_upsample_matrix(H, bn))
        Uw = jnp.asarray(bilinear_upsample_matrix(W, bn))
        pooled = jnp.einsum('ph,nchw,qw->ncpq', Ph, x_nchw, Pw)
        z = jnp.einsum('ncpq,cr->nrpq', pooled, W_eff) + b_eff.reshape(1, -1, 1, 1)
        z = jnp.maximum(z, 0.0)
        up = jnp.einsum('hp,nrpq,wq->nrhw', Uh, z, Uw)
        outs.append(up)
    return jnp.concatenate(outs, axis=1)


if __name__ == "__main__":
    N, Cin, H, W = 2, 8, 16, 16
    reduction_dim = 2
    bins = (1, 2, 3, 6)

    key = jax.random.PRNGKey(0)
    kx, kp = jax.random.split(key)
    x = jax.random.normal(kx, (N, Cin, H, W), jnp.float32)
    params = make_params(kp, Cin, reduction_dim, bins)

    out = ppm_forward(x, params, bins)
    out = jax.block_until_ready(out)

    expected_channels = Cin + len(bins) * reduction_dim
    assert out.shape == (N, expected_channels, H, W), out.shape
    assert bool(jnp.all(jnp.isfinite(out)))

    ref = jax.block_until_ready(ppm_reference(x, params, bins))
    max_err = float(jnp.max(jnp.abs(out - ref)))
    assert max_err < 1e-3, f"mismatch vs reference: {max_err}"

    print("KERNEL_OK")
</pallas_src>

<mosaic_0001>
module attributes {stable_mosaic.version = 11 : i64} {
  func.func @ppm_fused_kernel(%arg0: i32, %arg1: i32, %arg2: memref<1x8x256xf32, #tpu.memory_space<vmem>>, %arg3: memref<256x50xf32, #tpu.memory_space<vmem>>, %arg4: memref<8x8xf32, #tpu.memory_space<vmem>>, %arg5: memref<8x1xf32, #tpu.memory_space<vmem>>, %arg6: memref<8x50xf32, #tpu.memory_space<vmem>>, %arg7: memref<50x256xf32, #tpu.memory_space<vmem>>, %arg8: memref<1x8x256xf32, #tpu.memory_space<vmem>>, %arg9: memref<8x50xf32, #tpu.memory_space<vmem>>) attributes {dimension_semantics = [#tpu.dimension_semantics<parallel>, #tpu.dimension_semantics<arbitrary>], iteration_bounds = array<i64: 2, 1>, scalar_prefetch = 0 : i64, scratch_operands = 1 : i64, tpu.core_type = #tpu.core_type<tc>, window_params = [{transform_indices = @transform_0, window_bounds = array<i64: 1, 8, 256>}, {pipeline_mode = #tpu.pipeline_mode<synchronous>, transform_indices = @transform_1, window_bounds = array<i64: 256, 50>}, {transform_indices = @transform_2, window_bounds = array<i64: 8, 8>}, {pipeline_mode = #tpu.pipeline_mode<synchronous>, transform_indices = @transform_3, window_bounds = array<i64: 8, 1>}, {pipeline_mode = #tpu.pipeline_mode<synchronous>, transform_indices = @transform_4, window_bounds = array<i64: 8, 50>}, {pipeline_mode = #tpu.pipeline_mode<synchronous>, transform_indices = @transform_5, window_bounds = array<i64: 50, 256>}, {transform_indices = @transform_6, window_bounds = array<i64: 1, 8, 256>}]} {
    %c0_i32 = arith.constant 0 : i32
    %0 = arith.cmpi eq, %arg1, %c0_i32 : i32
    %1 = arith.extui %0 : i1 to i32
    %c0_i32_0 = arith.constant 0 : i32
    %2 = arith.cmpi ne, %1, %c0_i32_0 : i32
    scf.if %2 {
      %cst_14 = arith.constant 0.000000e+00 : f32
      %15 = vector.broadcast %cst_14 : f32 to vector<8x50xf32>
      %c0_15 = arith.constant 0 : index
      %c0_16 = arith.constant 0 : index
      %16 = vector.load %arg9[%c0_15, %c0_16] : memref<8x50xf32, #tpu.memory_space<vmem>>, vector<8x50xf32>
      tpu.vector_store %arg9[%c0_15, %c0_16], %15 {strides = array<i32>} : memref<8x50xf32, #tpu.memory_space<vmem>>, vector<8x50xf32>,
    } else {
    }
    %c0 = arith.constant 0 : index
    %c0_1 = arith.constant 0 : index
    %c0_2 = arith.constant 0 : index
    %3 = vector.load %arg2[%c0, %c0_1, %c0_2] : memref<1x8x256xf32, #tpu.memory_space<vmem>>, vector<1x8x256xf32>
    %4 = vector.shape_cast %3 : vector<1x8x256xf32> to vector<8x256xf32>
    %c0_3 = arith.constant 0 : index
    %c0_4 = arith.constant 0 : index
    %5 = vector.load %arg3[%c0_3, %c0_4] : memref<256x50xf32, #tpu.memory_space<vmem>>, vector<256x50xf32>
    %cst = arith.constant dense<0.000000e+00> : vector<8x50xf32>
    %6 = tpu.matmul %4, %5, %cst {dimension_numbers = #tpu.dot_dimension_numbers<[1], [0], [0], [1], [0, 0, 1, 1], [], []>} : vector<8x256xf32>, vector<256x50xf32>, vector<8x50xf32> -> vector<8x50xf32>
    %c0_5 = arith.constant 0 : index
    %c0_6 = arith.constant 0 : index
    %7 = vector.load %arg9[%c0_5, %c0_6] : memref<8x50xf32, #tpu.memory_space<vmem>>, vector<8x50xf32>
    %c0_7 = arith.constant 0 : index
    %c0_8 = arith.constant 0 : index
    %8 = vector.load %arg4[%c0_7, %c0_8] : memref<8x8xf32, #tpu.memory_space<vmem>>, vector<8x8xf32>
    %cst_9 = arith.constant dense<0.000000e+00> : vector<8x50xf32>
    %9 = tpu.matmul %8, %6, %cst_9 {dimension_numbers = #tpu.dot_dimension_numbers<[1], [0], [0], [1], [0, 0, 1, 1], [], []>} : vector<8x8xf32>, vector<8x50xf32>, vector<8x50xf32> -> vector<8x50xf32>
    %10 = arith.addf %7, %9 : vector<8x50xf32>
    %c0_10 = arith.constant 0 : index
    %c0_11 = arith.constant 0 : index
    %11 = vector.load %arg9[%c0_10, %c0_11] : memref<8x50xf32, #tpu.memory_space<vmem>>, vector<8x50xf32>
    tpu.vector_store %arg9[%c0_10, %c0_11], %10 {strides = array<i32>} : memref<8x50xf32, #tpu.memory_space<vmem>>, vector<8x50xf32>,
    %c0_i32_12 = arith.constant 0 : i32
    %12 = arith.cmpi eq, %arg1, %c0_i32_12 : i32
    %13 = arith.extui %12 : i1 to i32
    %c0_i32_13 = arith.constant 0 : i32
    %14 = arith.cmpi ne, %13, %c0_i32_13 : i32
    scf.if %14 {
      %c0_14 = arith.constant 0 : index
      %c0_15 = arith.constant 0 : index
      %15 = vector.load %arg9[%c0_14, %c0_15] : memref<8x50xf32, #tpu.memory_space<vmem>>, vector<8x50xf32>
      %c0_16 = arith.constant 0 : index
      %c0_17 = arith.constant 0 : index
      %16 = vector.load %arg5[%c0_16, %c0_17] : memref<8x1xf32, #tpu.memory_space<vmem>>, vector<8x1xf32>
      %17 = vector.broadcast %16 : vector<8x1xf32> to vector<8x50xf32>
      %18 = arith.addf %15, %17 : vector<8x50xf32>
      %cst_18 = arith.constant 0.000000e+00 : f32
      %19 = vector.broadcast %cst_18 : f32 to vector<8x50xf32>
      %20 = arith.maximumf %18, %19 : vector<8x50xf32>
      %c0_19 = arith.constant 0 : index
      %c0_20 = arith.constant 0 : index
      %21 = vector.load %arg6[%c0_19, %c0_20] : memref<8x50xf32, #tpu.memory_space<vmem>>, vector<8x50xf32>
      %22 = arith.mulf %20, %21 : vector<8x50xf32>
      %c0_21 = arith.constant 0 : index
      %c0_22 = arith.constant 0 : index
      %23 = vector.load %arg7[%c0_21, %c0_22] : memref<50x256xf32, #tpu.memory_space<vmem>>, vector<50x256xf32>
      %cst_23 = arith.constant dense<0.000000e+00> : vector<8x256xf32>
      %24 = tpu.matmul %22, %23, %cst_23 {dimension_numbers = #tpu.dot_dimension_numbers<[1], [0], [0], [1], [0, 0, 1, 1], [], []>} : vector<8x50xf32>, vector<50x256xf32>, vector<8x256xf32> -> vector<8x256xf32>
      %c0_24 = arith.constant 0 : index
      %c0_25 = arith.constant 0 : index
      %c0_26 = arith.constant 0 : index
      %25 = vector.load %arg8[%c0_24, %c0_25, %c0_26] : memref<1x8x256xf32, #tpu.memory_space<vmem>>, vector<1x8x256xf32>
      %26 = vector.shape_cast %25 : vector<1x8x256xf32> to vector<8x256xf32>
      %27 = vector.shape_cast %24 : vector<8x256xf32> to vector<1x8x256xf32>
      tpu.vector_store %arg8[%c0_24, %c0_25, %c0_26], %27 {strides = array<i32>} : memref<1x8x256xf32, #tpu.memory_space<vmem>>, vector<1x8x256xf32>,
    } else {
    }
    return
  }
  func.func @transform_0(%arg0: i32, %arg1: i32) -> (i32, i32, i32) {
    %c0_i32 = arith.constant 0 : i32
    %c0_i32_0 = arith.constant 0 : i32
    return %arg0, %arg1, %c0_i32 : i32, i32, i32
  }
  func.func @transform_1(%arg0: i32, %arg1: i32) -> (i32, i32) {
    %c0_i32 = arith.constant 0 : i32
    %c0_i32_0 = arith.constant 0 : i32
    %c0_i32_1 = arith.constant 0 : i32
    return %c0_i32, %c0_i32_0 : i32, i32
  }
  func.func @transform_2(%arg0: i32, %arg1: i32) -> (i32, i32) {
    %c0_i32 = arith.constant 0 : i32
    %c0_i32_0 = arith.constant 0 : i32
    return %c0_i32, %arg1 : i32, i32
  }
  func.func @transform_3(%arg0: i32, %arg1: i32) -> (i32, i32) {
    %c0_i32 = arith.constant 0 : i32
    %c0_i32_0 = arith.constant 0 : i32
    %c0_i32_1 = arith.constant 0 : i32
    return %c0_i32, %c0_i32_0 : i32, i32
  }
  func.func @transform_4(%arg0: i32, %arg1: i32) -> (i32, i32) {
    %c0_i32 = arith.constant 0 : i32
    %c0_i32_0 = arith.constant 0 : i32
    %c0_i32_1 = arith.constant 0 : i32
    return %c0_i32, %c0_i32_0 : i32, i32
  }
  func.func @transform_5(%arg0: i32, %arg1: i32) -> (i32, i32) {
    %c0_i32 = arith.constant 0 : i32
    %c0_i32_0 = arith.constant 0 : i32
    %c0_i32_1 = arith.constant 0 : i32
    return %c0_i32, %c0_i32_0 : i32, i32
  }
  func.func @transform_6(%arg0: i32, %arg1: i32) -> (i32, i32, i32) {
    %c0_i32 = arith.constant 0 : i32
    %c0_i32_0 = arith.constant 0 : i32
    %c0_i32_1 = arith.constant 0 : i32
    return %arg0, %c0_i32, %c0_i32_0 : i32, i32, i32
  }
}

</mosaic_0001>

<llo_original>
// kernel: tpu_custom_call.1
$region0: #{tpu_custom_call.1}
  #allocation0 [shape = 'u32[]', space=smem, size = 0x4, offset = 0x4, fixed_abs, tag = 'smem constant byte address 0x4 - core index']
  #allocation1 [shape = 'u32[144,128]{1,0:T(1,128)}', space=vmem, size = 0x12000, scoped, tag = 'internal scratch']
  #allocation2 [shape = 'f32[8,50]{1,0:T(8,128)}', space=vmem, size = 0x1000, scoped, tag = 'scratch operand']
  %s0 = inlined_call_operand.hbm [shape: f32[2,8,256], index: 0, kind: input, shape index: {}]
  %s1 = inlined_call_operand.hbm [shape: f32[256,50], index: 1, kind: input, shape index: {}]
  %s2 = inlined_call_operand.hbm [shape: f32[8,8], index: 2, kind: input, shape index: {}]
  %s3 = inlined_call_operand.hbm [shape: f32[8,1], index: 3, kind: input, shape index: {}]
  %s4 = inlined_call_operand.hbm [shape: f32[8,50], index: 4, kind: input, shape index: {}]
  %s5 = inlined_call_operand.hbm [shape: f32[50,256], index: 5, kind: input, shape index: {}]
  %s6 = inlined_call_operand.hbm [shape: f32[2,8,256], index: 6, kind: output, shape index: {}]
  %s7 = sld [smem:[#allocation0]]
  $region89: #{tpu_custom_call.1} parent=0
    _
  %s9 = ssub.s32 1, %s7
  %s10 = scalar_select 0, %s9, %s7
  $region1: #{tpu_custom_call.1} parent=0
    #allocation3 [shape = 'u8[16384]{0}', space=vmem, size = 0x4000, scoped, tag = 'input window, operand 0']
    #allocation4 [shape = 's32[2]{0}', space=sflag, size = 0x8, scoped, tag = 'scoped memory for tpu_custom_call.1']
    #allocation5 [shape = 's32[2]{0}', space=sflag, size = 0x8, scoped, tag = 'scoped memory for tpu_custom_call.1']
    #allocation6 [shape = 'u8[131072]{0}', space=vmem, size = 0x20000, scoped, tag = 'input window, operand 1, single buffered']
    #allocation7 [shape = 's32[1]{0}', space=sflag, size = 0x4, scoped, tag = 'scoped memory for tpu_custom_call.1']
    #allocation8 [shape = 'u8[4096]{0}', space=vmem, size = 0x1000, scoped, tag = 'input window, operand 2, single buffered']
    #allocation9 [shape = 'u8[4096]{0}', space=vmem, size = 0x1000, scoped, tag = 'input window, operand 3, single buffered']
    #allocation10 [shape = 's32[1]{0}', space=sflag, size = 0x4, scoped, tag = 'scoped memory for tpu_custom_call.1']
    #allocation11 [shape = 'u8[4096]{0}', space=vmem, size = 0x1000, scoped, tag = 'input window, operand 4, single buffered']
    #allocation12 [shape = 'u8[57344]{0}', space=vmem, size = 0xe000, scoped, tag = 'input window, operand 5, single buffered']
    #allocation13 [shape = 's32[1]{0}', space=sflag, size = 0x4, scoped, tag = 'scoped memory for tpu_custom_call.1']
    #allocation14 [shape = 'u8[16384]{0}', space=vmem, size = 0x4000, scoped, tag = 'output window, operand 0']
    %11 = vsyncpa [#allocation4], 0
    %s12 = scalar_lea.sflag [#allocation4], 1
    %13 = vsyncpa %s12, 0
    %14 = vsyncpa [#allocation7], 0
    %15 = vsyncpa [#allocation10], 0
    %16 = vsyncpa [#allocation13], 0
    %17 = vsyncpa [#allocation5], 0
    %s18 = scalar_lea.sflag [#allocation5], 1
    %19 = vsyncpa %s18, 0
    loop: start=0, step=1, limit=4
    $region2: #{tpu_custom_call.1} parent=1 // loop_pre_header
      _
    $region3: #{tpu_custom_call.1} parent=1 // loop_header
      %s21 = sphi 0, %s25
      %p22 = scmp.ge.s32.totalorder %s21, 4
      %s28 = sphi 0, %s40
      %s29 = sphi 0, %s36
      %s30 = sphi 0, %s28
      %s31 = sphi 0, %s29
      %s32 = sphi 0, %s30
      %s33 = sphi 0, %s31
      %s45 = sphi 0, %s47
      %s48 = sphi 0, %s45
      %s49 = sphi 0, %s48
      %s65 = sphi 0, %s49
      %s69 = sphi 0, %s69
      %s71 = sphi 0, %s69
      %s72 = sphi 0, %s71
      %s86 = sphi 0, %s72
      %s92 = sphi 0, %s94
      %s95 = sphi 0, %s92
      %s96 = sphi 0, %s95
      %s112 = sphi 0, %s96
      %s116 = sphi 0, %s116
      %s118 = sphi 0, %s116
      %s119 = sphi 0, %s118
      %s133 = sphi 0, %s119
      %s137 = sphi 0, %s137
      %s139 = sphi 0, %s137
      %s140 = sphi 0, %s139
      %s154 = sphi 0, %s140
      %s158 = sphi 0, %s158
      %s160 = sphi 0, %s158
      %s161 = sphi 0, %s160
      %s175 = sphi 0, %s161
      %s181 = sphi 0, %s183
      %s184 = sphi 0, %s181
      %s185 = sphi 0, %s184
      %s201 = sphi 0, %s185
    $region4: #{tpu_custom_call.1} parent=1 // loop_header_branch
      %24 = sbr.rel (%p22) target = $region8
    $region5: #{tpu_custom_call.1} parent=1 // loop_body
      %s26 = ssub.s32 %s21, 1
      %s27 = ssub.s32 %s21, 2
      %s34 = sadd.s32 1, %s29
      %p35 = scmp.ge.s32.totalorder %s34, 1
      %s36 = scalar_select %p35, 0, %s34
      %s37 = sadd.s32 1, %s28
      %s38 = scalar_select %p35, %s37, %s28
      %p39 = scmp.ge.s32.totalorder %s38, 2
      %s40 = scalar_select %p39, 0, %s38
      %s41 = ssub.s32 %s28, %s40
      %s42 = ssub.s32 %s29, %s36
      %s43 = sor.u32 %s41, %s42
      %p44 = scmp.eq.s32.totalorder %s43, 0
      %s46 = sadd.s32 %s45, 1
      %s47 = scalar_select %p44, %s45, %s46
      %p50 = pneg %p44
      %p51 = scmp.eq.s32.totalorder %s21, 1
      %p52 = por %p50, %p51
      %p53 = scmp.ne.s32.totalorder %s45, %s48
      %p54 = scmp.eq.s32.totalorder %s21, 0
      %p55 = por %p53, %p54
      %p56 = scmp.ne.s32.totalorder %s45, %s48
      %p57 = scmp.eq.s32.totalorder %s26, 1
      %p58 = por %p56, %p57
      %p59 = scmp.ne.s32.totalorder %s48, %s49
      %p60 = scmp.eq.s32.totalorder %s26, 0
      %p61 = por %p59, %p60
      %p62 = scmp.ne.s32.totalorder %s48, %s49
      %p63 = scmp.eq.s32.totalorder %s27, 1
      %p64 = por %p62, %p63
      %p66 = scmp.ne.s32.totalorder %s49, %s65
      %p67 = scmp.eq.s32.totalorder %s27, 0
      %p68 = por %p66, %p67
      %s70 = sadd.s32 %s69, 1
      %p73 = scmp.eq.s32.totalorder %s21, 1
      %p74 = scmp.ne.s32.totalorder %s69, %s71
      %p75 = scmp.eq.s32.totalorder %s21, 0
      %p76 = por %p74, %p75
      %p77 = scmp.ne.s32.totalorder %s69, %s71
      %p78 = scmp.eq.s32.totalorder %s26, 1
      %p79 = por %p77, %p78
      %p80 = scmp.ne.s32.totalorder %s71, %s72
      %p81 = scmp.eq.s32.totalorder %s26, 0
      %p82 = por %p80, %p81
      %p83 = scmp.ne.s32.totalorder %s71, %s72
      %p84 = scmp.eq.s32.totalorder %s27, 1
      %p85 = por %p83, %p84
      %p87 = scmp.ne.s32.totalorder %s72, %s86
      %p88 = scmp.eq.s32.totalorder %s27, 0
      %p89 = por %p87, %p88
      %s90 = ssub.s32 %s29, %s36
      %p91 = scmp.eq.s32.totalorder %s90, 0
      %s93 = sadd.s32 %s92, 1
      %s94 = scalar_select %p91, %s92, %s93
      %p97 = pneg %p91
      %p98 = scmp.eq.s32.totalorder %s21, 1
      %p99 = por %p97, %p98
      %p100 = scmp.ne.s32.totalorder %s92, %s95
      %p101 = scmp.eq.s32.totalorder %s21, 0
      %p102 = por %p100, %p101
      %p103 = scmp.ne.s32.totalorder %s92, %s95
      %p104 = scmp.eq.s32.totalorder %s26, 1
      %p105 = por %p103, %p104
      %p106 = scmp.ne.s32.totalorder %s95, %s96
      %p107 = scmp.eq.s32.totalorder %s26, 0
      %p108 = por %p106, %p107
      %p109 = scmp.ne.s32.totalorder %s95, %s96
      %p110 = scmp.eq.s32.totalorder %s27, 1
      %p111 = por %p109, %p110
      %p113 = scmp.ne.s32.totalorder %s96, %s112
      %p114 = scmp.eq.s32.totalorder %s27, 0
      %p115 = por %p113, %p114
      %s117 = sadd.s32 %s116, 1
      %p120 = scmp.eq.s32.totalorder %s21, 1
      %p121 = scmp.ne.s32.totalorder %s116, %s118
      %p122 = scmp.eq.s32.totalorder %s21, 0
      %p123 = por %p121, %p122
      %p124 = scmp.ne.s32.totalorder %s116, %s118
      %p125 = scmp.eq.s32.totalorder %s26, 1
      %p126 = por %p124, %p125
      %p127 = scmp.ne.s32.totalorder %s118, %s119
      %p128 = scmp.eq.s32.totalorder %s26, 0
      %p129 = por %p127, %p128
      %p130 = scmp.ne.s32.totalorder %s118, %s119
      %p131 = scmp.eq.s32.totalorder %s27, 1
      %p132 = por %p130, %p131
      %p134 = scmp.ne.s32.totalorder %s119, %s133
      %p135 = scmp.eq.s32.totalorder %s27, 0
      %p136 = por %p134, %p135
      %s138 = sadd.s32 %s137, 1
      %p141 = scmp.eq.s32.totalorder %s21, 1
      %p142 = scmp.ne.s32.totalorder %s137, %s139
      %p143 = scmp.eq.s32.totalorder %s21, 0
      %p144 = por %p142, %p143
      %p145 = scmp.ne.s32.totalorder %s137, %s139
      %p146 = scmp.eq.s32.totalorder %s26, 1
      %p147 = por %p145, %p146
      %p148 = scmp.ne.s32.totalorder %s139, %s140
      %p149 = scmp.eq.s32.totalorder %s26, 0
      %p150 = por %p148, %p149
      %p151 = scmp.ne.s32.totalorder %s139, %s140
      %p152 = scmp.eq.s32.totalorder %s27, 1
      %p153 = por %p151, %p152
      %p155 = scmp.ne.s32.totalorder %s140, %s154
      %p156 = scmp.eq.s32.totalorder %s27, 0
      %p157 = por %p155, %p156
      %s159 = sadd.s32 %s158, 1
      %p162 = scmp.eq.s32.totalorder %s21, 1
      %p163 = scmp.ne.s32.totalorder %s158, %s160
      %p164 = scmp.eq.s32.totalorder %s21, 0
      %p165 = por %p163, %p164
      %p166 = scmp.ne.s32.totalorder %s158, %s160
      %p167 = scmp.eq.s32.totalorder %s26, 1
      %p168 = por %p166, %p167
      %p169 = scmp.ne.s32.totalorder %s160, %s161
      %p170 = scmp.eq.s32.totalorder %s26, 0
      %p171 = por %p169, %p170
      %p172 = scmp.ne.s32.totalorder %s160, %s161
      %p173 = scmp.eq.s32.totalorder %s27, 1
      %p174 = por %p172, %p173
      %p176 = scmp.ne.s32.totalorder %s161, %s175
      %p177 = scmp.eq.s32.totalorder %s27, 0
      %p178 = por %p176, %p177
      %s179 = ssub.s32 %s28, %s40
      %p180 = scmp.eq.s32.totalorder %s179, 0
      %s182 = sadd.s32 %s181, 1
      %s183 = scalar_select %p180, %s181, %s182
      %p186 = pneg %p180
      %p187 = scmp.eq.s32.totalorder %s21, 1
      %p188 = por %p186, %p187
      %p189 = scmp.ne.s32.totalorder %s181, %s184
      %p190 = scmp.eq.s32.totalorder %s21, 0
      %p191 = por %p189, %p190
      %p192 = scmp.ne.s32.totalorder %s181, %s184
      %p193 = scmp.eq.s32.totalorder %s26, 1
      %p194 = por %p192, %p193
      %p195 = scmp.ne.s32.totalorder %s184, %s185
      %p196 = scmp.eq.s32.totalorder %s26, 0
      %p197 = por %p195, %p196
      %p198 = scmp.ne.s32.totalorder %s184, %s185
      %p199 = scmp.eq.s32.totalorder %s27, 1
      %p200 = por %p198, %p199
      %p202 = scmp.ne.s32.totalorder %s185, %s201
      %p203 = scmp.eq.s32.totalorder %s27, 0
      %p204 = por %p202, %p203
      %p205 = scmp.le.s32.totalorder 1, %s21
      %p206 = scmp.lt.s32.totalorder %s21, 3
      %p207 = pnand %p205, %p206
      %p208 = pneg %p207
      // Predicated region
      $region9: #{tpu_custom_call.1} parent=5 // pred_check
        _
      $region10: #{tpu_custom_call.1} parent=5 // pred_check_branch
        %210 = sbr.rel (%p207) target = $region12
      $region11: #{tpu_custom_call.1} parent=5 // pred_region
        %s211 = ssub.s32 %s21, 1
        // Predicated region
        $region13: #{tpu_custom_call.1} parent=11 // pred_check
          %p212 = pneg %p82
        $region14: #{tpu_custom_call.1} parent=11 // pred_check_branch
          %214 = sbr.rel (%p212) target = $region16
        $region15: #{tpu_custom_call.1} parent=11 // pred_region
          %s216 = ssub.s32 4096, 4096
          %217 = vsyncadd [#allocation7], %s216
          %s218 = sshll.u32 [#allocation6], 4
          %s219 = int_to_ptr.vmem [resolvable:$true] %s218
          %224 = dma.hbm_to_vmem [thread:$0]  %s1, 4096, %s219, [#allocation7], 128, 128, 8
        $region16: #{tpu_custom_call.1} parent=11 // pred_fallthru
          _
        // Predicated region
        $region17: #{tpu_custom_call.1} parent=11 // pred_check
          %p225 = pneg %p108
        $region18: #{tpu_custom_call.1} parent=11 // pred_check_branch
          %227 = sbr.rel (%p225) target = $region20
        $region19: #{tpu_custom_call.1} parent=11 // pred_region
          %s229 = ssub.s32 128, 128
          %230 = vsyncadd [#allocation7], %s229
          %s231 = smul.addr %s31, 128
          %s232 = scalar_lea.hbm %s2, %s231
          %s234 = sshll.u32 [#allocation8], 4
          %s235 = int_to_ptr.vmem [resolvable:$true] %s234
          %237 = dma.hbm_to_vmem [thread:$0]  %s232, 128, %s235, [#allocation7]
        $region20: #{tpu_custom_call.1} parent=11 // pred_fallthru
          _
        // Predicated region
        $region21: #{tpu_custom_call.1} parent=11 // pred_check
          %p238 = pneg %p129
        $region22: #{tpu_custom_call.1} parent=11 // pred_check_branch
          %240 = sbr.rel (%p238) target = $region24
        $region23: #{tpu_custom_call.1} parent=11 // pred_region
          %s242 = ssub.s32 128, 128
          %243 = vsyncadd [#allocation10], %s242
          %s245 = sshll.u32 [#allocation9], 4
          %s246 = int_to_ptr.vmem [resolvable:$true] %s245
          %248 = dma.hbm_to_vmem [thread:$0]  %s3, 128, %s246, [#allocation10]
        $region24: #{tpu_custom_call.1} parent=11 // pred_fallthru
          _
        // Predicated region
        $region25: #{tpu_custom_call.1} parent=11 // pred_check
          %p249 = pneg %p150
        $region26: #{tpu_custom_call.1} parent=11 // pred_check_branch
          %251 = sbr.rel (%p249) target = $region28
        $region27: #{tpu_custom_call.1} parent=11 // pred_region
          %s253 = ssub.s32 128, 128
          %254 = vsyncadd [#allocation10], %s253
          %s256 = sshll.u32 [#allocation11], 4
          %s257 = int_to_ptr.vmem [resolvable:$true] %s256
          %259 = dma.hbm_to_vmem [thread:$0]  %s4, 128, %s257, [#allocation10]
        $region28: #{tpu_custom_call.1} parent=11 // pred_fallthru
          _
        // Predicated region
        $region29: #{tpu_custom_call.1} parent=11 // pred_check
          %p260 = pneg %p171
        $region30: #{tpu_custom_call.1} parent=11 // pred_check_branch
          %262 = sbr.rel (%p260) target = $region32
        $region31: #{tpu_custom_call.1} parent=11 // pred_region
          %s264 = ssub.s32 1792, 1792
          %265 = vsyncadd [#allocation13], %s264
          %s266 = sshll.u32 [#allocation12], 4
          %s267 = int_to_ptr.vmem [resolvable:$true] %s266
          %272 = dma.hbm_to_vmem [thread:$0]  %s5, 1792, %s267, [#allocation13], 256, 256, 16
        $region32: #{tpu_custom_call.1} parent=11 // pred_fallthru
          _
      $region12: #{tpu_custom_call.1} parent=5 // pred_fallthru
        _
      %p273 = scmp.lt.s32.totalorder %s21, 2
      // Predicated region
      $region33: #{tpu_custom_call.1} parent=5 // pred_check
        %p274 = pneg %p273
      $region34: #{tpu_custom_call.1} parent=5 // pred_check_branch
        %276 = sbr.rel (%p274) target = $region36
      $region35: #{tpu_custom_call.1} parent=5 // pred_region
        // Predicated region
        $region37: #{tpu_custom_call.1} parent=35 // pred_check
          %p277 = pneg %p55
        $region38: #{tpu_custom_call.1} parent=35 // pred_check_branch
          %279 = sbr.rel (%p277) target = $region40
        $region39: #{tpu_custom_call.1} parent=35 // pred_region
          %s280 = sand.u32 %s45, 1
          %s281 = scalar_lea.sflag [#allocation4], %s280
          %s282 = sand.u32 %s45, 1
          %s283 = smul.addr %s282, 16
          %s284 = scalar_lea.vmem [#allocation3], %s283
          %s286 = ssub.s32 256, 256
          %287 = vsyncadd %s281, %s286
          %s288 = smul.addr %s29, 2
          %s289 = smul.addr %s28, 2
          %s290 = sadd.s32 %s288, %s289
          %s291 = smul.addr %s290, 128
          %s292 = scalar_lea.hbm %s0, %s291
          %s294 = sshll.u32 %s284, 4
          %s295 = int_to_ptr.vmem [resolvable:$true] %s294
          %297 = dma.hbm_to_vmem [thread:$0]  %s292, 256, %s295, %s281
        $region40: #{tpu_custom_call.1} parent=35 // pred_fallthru
          _
      $region36: #{tpu_custom_call.1} parent=5 // pred_fallthru
        _
      %p298 = scmp.le.s32.totalorder 1, %s21
      %p299 = scmp.lt.s32.totalorder %s21, 3
      %p300 = pnand %p298, %p299
      %p301 = pneg %p300
      // Predicated region
      $region41: #{tpu_custom_call.1} parent=5 // pred_check
        _
      $region42: #{tpu_custom_call.1} parent=5 // pred_check_branch
        %303 = sbr.rel (%p300) target = $region44
      $region43: #{tpu_custom_call.1} parent=5 // pred_region
        %s304 = ssub.s32 %s21, 1
        %s305 = sand.u32 %s48, 1
        %s306 = scalar_lea.sflag [#allocation4], %s305
        %s307 = sand.u32 %s48, 1
        %s308 = smul.addr %s307, 16
        %s309 = scalar_lea.vmem [#allocation3], %s308
        // Predicated region
        $region45: #{tpu_custom_call.1} parent=43 // pred_check
          %p310 = pneg %p61
        $region46: #{tpu_custom_call.1} parent=43 // pred_check_branch
          %312 = sbr.rel (%p310) target = $region48
        $region47: #{tpu_custom_call.1} parent=43 // pred_region
          %313 = dma.done %s306, 256
        $region48: #{tpu_custom_call.1} parent=43 // pred_fallthru
          _
        // Predicated region
        $region49: #{tpu_custom_call.1} parent=43 // pred_check
          %p314 = pneg %p82
        $region50: #{tpu_custom_call.1} parent=43 // pred_check_branch
          %316 = sbr.rel (%p314) target = $region52
        $region51: #{tpu_custom_call.1} parent=43 // pred_region
          %317 = dma.done [#allocation7], 4096
        $region52: #{tpu_custom_call.1} parent=43 // pred_fallthru
          _
        // Predicated region
        $region53: #{tpu_custom_call.1} parent=43 // pred_check
          %p318 = pneg %p108
        $region54: #{tpu_custom_call.1} parent=43 // pred_check_branch
          %320 = sbr.rel (%p318) target = $region56
        $region55: #{tpu_custom_call.1} parent=43 // pred_region
          %321 = dma.done [#allocation7], 128
        $region56: #{tpu_custom_call.1} parent=43 // pred_fallthru
          _
        // Predicated region
        $region57: #{tpu_custom_call.1} parent=43 // pred_check
          %p322 = pneg %p129
        $region58: #{tpu_custom_call.1} parent=43 // pred_check_branch
          %324 = sbr.rel (%p322) target = $region60
        $region59: #{tpu_custom_call.1} parent=43 // pred_region
          %325 = dma.done [#allocation10], 128
        $region60: #{tpu_custom_call.1} parent=43 // pred_fallthru
          _
        // Predicated region
        $region61: #{tpu_custom_call.1} parent=43 // pred_check
          %p326 = pneg %p150
        $region62: #{tpu_custom_call.1} parent=43 // pred_check_branch
          %328 = sbr.rel (%p326) target = $region64
        $region63: #{tpu_custom_call.1} parent=43 // pred_region
          %329 = dma.done [#allocation10], 128
        $region64: #{tpu_custom_call.1} parent=43 // pred_fallthru
          _
        // Predicated region
        $region65: #{tpu_custom_call.1} parent=43 // pred_check
          %p330 = pneg %p171
        $region66: #{tpu_custom_call.1} parent=43 // pred_check_branch
          %332 = sbr.rel (%p330) target = $region68
        $region67: #{tpu_custom_call.1} parent=43 // pred_region
          %333 = dma.done [#allocation13], 1792
        $region68: #{tpu_custom_call.1} parent=43 // pred_fallthru
          _
        %s334 = sand.u32 %s48, 1
        %s335 = scalar_lea.sflag [#allocation4], %s334
        %s336 = sand.u32 %s48, 1
        %s337 = smul.addr %s336, 16
        %s338 = scalar_lea.vmem [#allocation3], %s337
        %p339 = pneg %p61
        %p340 = pneg %p58
        %p341 = pneg %p82
        %p342 = pneg %p79
        %p343 = pneg %p108
        %p344 = pneg %p105
        %p345 = pneg %p129
        %p346 = pneg %p126
        %p347 = pneg %p150
        %p348 = pneg %p147
        %p349 = pneg %p171
        %p350 = pneg %p168
        %p351 = pneg %p197
        %p352 = pneg %p194
        %s353 = sand.u32 %s184, 1
        %s354 = scalar_lea.sflag [#allocation5], %s353
        %s355 = sand.u32 %s184, 1
        %s356 = smul.addr %s355, 16
        %s357 = scalar_lea.vmem [#allocation14], %s356
        %p358 = scmp.eq.s32.totalorder %s31, 0
        // Predicated region
        $region69: #{tpu_custom_call.1} parent=43 // pred_check
          %p359 = pneg %p358
        $region70: #{tpu_custom_call.1} parent=43 // pred_check_branch
          %361 = sbr.rel (%p359) target = $region72
        $region71: #{tpu_custom_call.1} parent=43 // pred_region
          %vm362 = vcmask 408576
          %363 = vst.msk [vmem:[#allocation2] sm:$0xff] %vm362, 0.0
        $region72: #{tpu_custom_call.1} parent=43 // pred_fallthru
          _
        %v364 = vld [vmem:[%s309] sm:$0xff]
        %v365 = vld [vmem:[%s309 + $0x8] sm:$0xff]
        %v366 = vld [vmem:[#allocation6] sm:$0xff]
        %v367 = vld [vmem:[#allocation6 + $0x8] sm:$0xff]
        %v368 = vld [vmem:[#allocation6 + $0x10] sm:$0xff]
        %v369 = vld [vmem:[#allocation6 + $0x18] sm:$0xff]
        %v370 = vld [vmem:[#allocation6 + $0x20] sm:$0xff]
        %v371 = vld [vmem:[#allocation6 + $0x28] sm:$0xff]
        %v372 = vld [vmem:[#allocation6 + $0x30] sm:$0xff]
        %v373 = vld [vmem:[#allocation6 + $0x38] sm:$0xff]
        %v374 = vld [vmem:[#allocation6 + $0x40] sm:$0xff]
        %v375 = vld [vmem:[#allocation6 + $0x48] sm:$0xff]
        %v376 = vld [vmem:[#allocation6 + $0x50] sm:$0xff]
        %v377 = vld [vmem:[#allocation6 + $0x58] sm:$0xff]
        %v378 = vld [vmem:[#allocation6 + $0x60] sm:$0xff]
        %v379 = vld [vmem:[#allocation6 + $0x68] sm:$0xff]
        %v380 = vld [vmem:[#allocation6 + $0x70] sm:$0xff]
        %v381 = vld [vmem:[#allocation6 + $0x78] sm:$0xff]
        %v382 = vld [vmem:[#allocation6 + $0x80] sm:$0xff]
        %v383 = vld [vmem:[#allocation6 + $0x88] sm:$0xff]
        %v384 = vld [vmem:[#allocation6 + $0x90] sm:$0xff]
        %v385 = vld [vmem:[#allocation6 + $0x98] sm:$0xff]
        %v386 = vld [vmem:[#allocation6 + $0xa0] sm:$0xff]
        %v387 = vld [vmem:[#allocation6 + $0xa8] sm:$0xff]
        %v388 = vld [vmem:[#allocation6 + $0xb0] sm:$0xff]
        %v389 = vld [vmem:[#allocation6 + $0xb8] sm:$0xff]
        %v390 = vld [vmem:[#allocation6 + $0xc0] sm:$0xff]
        %v391 = vld [vmem:[#allocation6 + $0xc8] sm:$0xff]
        %v392 = vld [vmem:[#allocation6 + $0xd0] sm:$0xff]
        %v393 = vld [vmem:[#allocation6 + $0xd8] sm:$0xff]
        %v394 = vld [vmem:[#allocation6 + $0xe0] sm:$0xff]
        %v395 = vld [vmem:[#allocation6 + $0xe8] sm:$0xff]
        %v396 = vld [vmem:[#allocation6 + $0xf0] sm:$0xff]
        %v397 = vld [vmem:[#allocation6 + $0xf8] sm:$0xff]
        %398 = vmatprep.subr.mxu0 0.0
        %399 = vmatpush1.msra.mxu0 %v366
        %400 = vmatprep.subr.mxu0 0.0
        %401 = vmatpush1.msra.mxu0 %v367
        %402 = vmatprep.subr.mxu0 0.0
        %403 = vmatpush1.msra.mxu0 %v368
        %404 = vmatprep.subr.mxu0 0.0
        %405 = vmatpush1.msra.mxu0 %v369
        %406 = vmatprep.subr.mxu0 0.0
        %407 = vmatpush1.msra.mxu0 %v370
        %408 = vmatprep.subr.mxu0 0.0
        %409 = vmatpush1.msra.mxu0 %v371
        %410 = vmatprep.subr.mxu0 0.0
        %411 = vmatpush1.msra.mxu0 %v372
        %412 = vmatprep.subr.mxu0 0.0
        %413 = vmatpush1.msra.mxu0 %v373
        %414 = vmatprep.subr.mxu0 0.0
        %415 = vmatpush1.msra.mxu0 %v374
        %416 = vmatprep.subr.mxu0 0.0
        %417 = vmatpush1.msra.mxu0 %v375
        %418 = vmatprep.subr.mxu0 0.0
        %419 = vmatpush1.msra.mxu0 %v376
        %420 = vmatprep.subr.mxu0 0.0
        %421 = vmatpush1.msra.mxu0 %v377
        %422 = vmatprep.subr.mxu0 0.0
        %423 = vmatpush1.msra.mxu0 %v378
        %424 = vmatprep.subr.mxu0 0.0
        %425 = vmatpush1.msra.mxu0 %v379
        %426 = vmatprep.subr.mxu0 0.0
        %427 = vmatpush1.msra.mxu0 %v380
        %428 = vmatprep.subr.mxu0 0.0
        %429 = vmatpush1.msra.mxu0 %v381
        %430 = vmatprep.subr.mxu0 0.0
        %431 = vmatpush1.msra.mxu0 %v382
        %432 = vmatprep.subr.mxu0 0.0
        %433 = vmatpush1.msra.mxu0 %v383
        %434 = vmatprep.subr.mxu0 0.0
        %435 = vmatpush1.msra.mxu0 %v384
        %436 = vmatprep.subr.mxu0 0.0
        %437 = vmatpush1.msra.mxu0 %v385
        %438 = vmatprep.subr.mxu0 0.0
        %439 = vmatpush1.msra.mxu0 %v386
        %440 = vmatprep.subr.mxu0 0.0
        %441 = vmatpush1.msra.mxu0 %v387
        %442 = vmatprep.subr.mxu0 0.0
        %443 = vmatpush1.msra.mxu0 %v388
        %444 = vmatprep.subr.mxu0 0.0
        %445 = vmatpush1.msra.mxu0 %v389
        %446 = vmatprep.subr.mxu0 0.0
        %447 = vmatpush1.msra.mxu0 %v390
        %448 = vmatprep.subr.mxu0 0.0
        %449 = vmatpush1.msra.mxu0 %v391
        %450 = vmatprep.subr.mxu0 0.0
        %451 = vmatpush1.msra.mxu0 %v392
        %452 = vmatprep.subr.mxu0 0.0
        %453 = vmatpush1.msra.mxu0 %v393
        %454 = vmatprep.subr.mxu0 0.0
        %455 = vmatpush1.msra.mxu0 %v394
        %456 = vmatprep.subr.mxu0 0.0
        %457 = vmatpush1.msra.mxu0 %v395
        %458 = vmatprep.subr.mxu0 0.0
        %459 = vmatpush1.msra.mxu0 %v396
        %460 = vmatprep.subr.mxu0 0.0
        %461 = vmatpush1.msra.mxu0 %v397
        %462 = vmatprep.mubr.f32.mxu0 %v365
        %463 = vmatmul.mubr.f32.gmra.mrb[0].mxu0 %v364
        %v464 = vpop.f32.mrb[0].mxu0
        %v465 = vadd.f32 0.0, %v464
        %v466 = vpop.f32.mrb[0].mxu0
        %467 = vdwg.mxu0
        %v468 = vld [vmem:[#allocation2] sm:$0xff]
        %v469 = vld [vmem:[#allocation8] sm:$0xff]
        %vm470 = vcmask 64512
        %v472 = vsel %vm470, %v469, 0
        %474 = vmatprep.subr.mxu0 0.0
        %475 = vmatpush1.msra.mxu0 %v465
        %476 = vmatprep.subr.mxu0 0.0
        %477 = vmatpush1.msra.mxu0 0.0
        %478 = vmatprep.subr.mxu0 0.0
        %479 = vmatpush1.msra.mxu0 0.0
        %480 = vmatprep.subr.mxu0 0.0
        %481 = vmatpush1.msra.mxu0 0.0
        %482 = vmatprep.subr.mxu0 0.0
        %483 = vmatpush1.msra.mxu0 0.0
        %484 = vmatprep.subr.mxu0 0.0
        %485 = vmatpush1.msra.mxu0 0.0
        %486 = vmatprep.subr.mxu0 0.0
        %487 = vmatpush1.msra.mxu0 0.0
        %488 = vmatprep.subr.mxu0 0.0
        %489 = vmatpush1.msra.mxu0 0.0
        %490 = vmatprep.subr.mxu0 0.0
        %491 = vmatpush1.msra.mxu0 0.0
        %492 = vmatprep.subr.mxu0 0.0
        %493 = vmatpush1.msra.mxu0 0.0
        %494 = vmatprep.subr.mxu0 0.0
        %495 = vmatpush1.msra.mxu0 0.0
        %496 = vmatprep.subr.mxu0 0.0
        %497 = vmatpush1.msra.mxu0 0.0
        %498 = vmatprep.subr.mxu0 0.0
        %499 = vmatpush1.msra.mxu0 0.0
        %500 = vmatprep.subr.mxu0 0.0
        %501 = vmatpush1.msra.mxu0 0.0
        %502 = vmatprep.subr.mxu0 0.0
        %503 = vmatpush1.msra.mxu0 0.0
        %504 = vmatprep.subr.mxu0 0.0
        %505 = vmatpush1.msra.mxu0 0.0
        %506 = vmatprep.subr.mxu0 0.0
        %507 = vmatpush1.msra.mxu0 0.0
        %508 = vmatprep.subr.mxu0 0.0
        %509 = vmatpush1.msra.mxu0 0.0
        %510 = vmatprep.subr.mxu0 0.0
        %511 = vmatpush1.msra.mxu0 0.0
        %512 = vmatprep.subr.mxu0 0.0
        %513 = vmatpush1.msra.mxu0 0.0
        %514 = vmatprep.subr.mxu0 0.0
        %515 = vmatpush1.msra.mxu0 0.0
        %516 = vmatprep.subr.mxu0 0.0
        %517 = vmatpush1.msra.mxu0 0.0
        %518 = vmatprep.subr.mxu0 0.0
        %519 = vmatpush1.msra.mxu0 0.0
        %520 = vmatprep.subr.mxu0 0.0
        %521 = vmatpush1.msra.mxu0 0.0
        %522 = vmatprep.subr.mxu0 0.0
        %523 = vmatpush1.msra.mxu0 0.0
        %524 = vmatprep.subr.mxu0 0.0
        %525 = vmatpush1.msra.mxu0 0.0
        %526 = vmatprep.subr.mxu0 0.0
        %527 = vmatpush1.msra.mxu0 0.0
        %528 = vmatprep.subr.mxu0 0.0
        %529 = vmatpush1.msra.mxu0 0.0
        %530 = vmatprep.subr.mxu0 0.0
        %531 = vmatpush1.msra.mxu0 0.0
        %532 = vmatprep.subr.mxu0 0.0
        %533 = vmatpush1.msra.mxu0 0.0
        %534 = vmatprep.subr.mxu0 0.0
        %535 = vmatpush1.msra.mxu0 0.0
        %536 = vmatprep.subr.mxu0 0.0
        %537 = vmatpush1.msra.mxu0 0.0
        %538 = vmatprep.mubr.f32.mxu0 0.0
        %539 = vmatmul.mubr.f32.gmra.mrb[0].mxu0 %v472
        %v540 = vpop.f32.mrb[0].mxu0
        %v541 = vadd.f32 0.0, %v540
        %v542 = vpop.f32.mrb[0].mxu0
        %543 = vdwg.mxu0
        %v544 = vadd.f32 %v468, %v541
        %vm545 = vcmask 408576
        %546 = vst.msk [vmem:[#allocation2] sm:$0xff] %vm545, %v544
        // Predicated region
        $region73: #{tpu_custom_call.1} parent=43 // pred_check
          %p547 = pneg %p358
        $region74: #{tpu_custom_call.1} parent=43 // pred_check_branch
          %549 = sbr.rel (%p547) target = $region76
        $region75: #{tpu_custom_call.1} parent=43 // pred_region
          %v550 = vld [vmem:[#allocation2] sm:$0xff]
          %v551 = vld [vmem:[#allocation9] sm:$0xff]
          %553 = vset.pattern.permute.xlu0 0
          %554 = vperm.xlu0 %553, %v551
          %v555 = vpop.permute.xlu0 %554
          %v557 = vadd.f32 %v550, %v555
          %v558 = vmax.f32 %v557, 0.0
          %v559 = vld [vmem:[#allocation11] sm:$0xff]
          %v560 = vmul.f32 %v558, %v559
          %v561 = vld [vmem:[#allocation12] sm:$0xff]
          %v562 = vld [vmem:[#allocation12 + $0x8] sm:$0xff]
          %v563 = vld [vmem:[#allocation12 + $0x10] sm:$0xff]
          %v564 = vld [vmem:[#allocation12 + $0x18] sm:$0xff]
          %v565 = vld [vmem:[#allocation12 + $0x20] sm:$0xff]
          %v566 = vld [vmem:[#allocation12 + $0x28] sm:$0xff]
          %v567 = vld [vmem:[#allocation12 + $0x30] sm:$0xff]
          %v568 = vld [vmem:[#allocation12 + $0x38] sm:$0xff]
          %v569 = vld [vmem:[#allocation12 + $0x40] sm:$0xff]
          %v570 = vld [vmem:[#allocation12 + $0x48] sm:$0xff]
          %v571 = vld [vmem:[#allocation12 + $0x50] sm:$0xff]
          %v572 = vld [vmem:[#allocation12 + $0x58] sm:$0xff]
          %v573 = vld [vmem:[#allocation12 + $0x60] sm:$0x3]
          %v574 = vld [vmem:[#allocation12 + $0x68] sm:$0x3]
          %v576 = vsel %vm545, %v560, 0
          %vm578 = vcmask 1041408
          %v580 = vsel %vm578, %v573, 0
          %v583 = vsel %vm578, %v574, 0
          %585 = vmatprep.subr.mxu0 %v562
          %586 = vmatpush1.msra.mxu0 %v561
          %587 = vmatprep.subr.mxu0 %v564
          %588 = vmatpush1.msra.mxu0 %v563
          %589 = vmatprep.subr.mxu0 %v566
          %590 = vmatpush1.msra.mxu0 %v565
          %591 = vmatprep.subr.mxu0 %v568
          %592 = vmatpush1.msra.mxu0 %v567
          %593 = vmatprep.subr.mxu0 %v570
          %594 = vmatpush1.msra.mxu0 %v569
          %595 = vmatprep.subr.mxu0 %v572
          %596 = vmatpush1.msra.mxu0 %v571
          %597 = vmatprep.subr.mxu0 %v583
          %598 = vmatpush1.msra.mxu0 %v580
          %599 = vmatprep.subr.mxu0 0.0
          %600 = vmatpush1.msra.mxu0 0.0
          %601 = vmatprep.subr.mxu0 0.0
          %602 = vmatpush1.msra.mxu0 0.0
          %603 = vmatprep.subr.mxu0 0.0
          %604 = vmatpush1.msra.mxu0 0.0
          %605 = vmatprep.subr.mxu0 0.0
          %606 = vmatpush1.msra.mxu0 0.0
          %607 = vmatprep.subr.mxu0 0.0
          %608 = vmatpush1.msra.mxu0 0.0
          %609 = vmatprep.subr.mxu0 0.0
          %610 = vmatpush1.msra.mxu0 0.0
          %611 = vmatprep.subr.mxu0 0.0
          %612 = vmatpush1.msra.mxu0 0.0
          %613 = vmatprep.subr.mxu0 0.0
          %614 = vmatpush1.msra.mxu0 0.0
          %615 = vmatprep.subr.mxu0 0.0
          %616 = vmatpush1.msra.mxu0 0.0
          %617 = vmatprep.subr.mxu0 0.0
          %618 = vmatpush1.msra.mxu0 0.0
          %619 = vmatprep.subr.mxu0 0.0
          %620 = vmatpush1.msra.mxu0 0.0
          %621 = vmatprep.subr.mxu0 0.0
          %622 = vmatpush1.msra.mxu0 0.0
          %623 = vmatprep.subr.mxu0 0.0
          %624 = vmatpush1.msra.mxu0 0.0
          %625 = vmatprep.subr.mxu0 0.0
          %626 = vmatpush1.msra.mxu0 0.0
          %627 = vmatprep.subr.mxu0 0.0
          %628 = vmatpush1.msra.mxu0 0.0
          %629 = vmatprep.subr.mxu0 0.0
          %630 = vmatpush1.msra.mxu0 0.0
          %631 = vmatprep.subr.mxu0 0.0
          %632 = vmatpush1.msra.mxu0 0.0
          %633 = vmatprep.subr.mxu0 0.0
          %634 = vmatpush1.msra.mxu0 0.0
          %635 = vmatprep.subr.mxu0 0.0
          %636 = vmatpush1.msra.mxu0 0.0
          %637 = vmatprep.subr.mxu0 0.0
          %638 = vmatpush1.msra.mxu0 0.0
          %639 = vmatprep.subr.mxu0 0.0
          %640 = vmatpush1.msra.mxu0 0.0
          %641 = vmatprep.subr.mxu0 0.0
          %642 = vmatpush1.msra.mxu0 0.0
          %643 = vmatprep.subr.mxu0 0.0
          %644 = vmatpush1.msra.mxu0 0.0
          %645 = vmatprep.subr.mxu0 0.0
          %646 = vmatpush1.msra.mxu0 0.0
          %647 = vmatprep.subr.mxu0 0.0
          %648 = vmatpush1.msra.mxu0 0.0
          %649 = vmatprep.mubr.f32.mxu0 0.0
          %650 = vmatmul.mubr.f32.gmra.mrb[0].mxu0 %v576
          %v651 = vpop.f32.mrb[0].mxu0
          %v652 = vadd.f32 0.0, %v651
          %v653 = vpop.f32.mrb[0].mxu0
          %v654 = vadd.f32 0.0, %v653
          %655 = vdwg.mxu0
          %656 = vst [vmem:[%s357] sm:$0xff] %v652
          %657 = vst [vmem:[%s357 + $0x8] sm:$0xff] %v654
        $region76: #{tpu_custom_call.1} parent=43 // pred_fallthru
          _
        %s658 = sand.u32 %s184, 1
        %s659 = scalar_lea.sflag [#allocation5], %s658
        %s660 = sand.u32 %s184, 1
        %s661 = smul.addr %s660, 16
        %s662 = scalar_lea.vmem [#allocation14], %s661
        // Predicated region
        $region77: #{tpu_custom_call.1} parent=43 // pred_check
          %p663 = pneg %p194
        $region78: #{tpu_custom_call.1} parent=43 // pred_check_branch
          %665 = sbr.rel (%p663) target = $region80
        $region79: #{tpu_custom_call.1} parent=43 // pred_region
          %s667 = ssub.s32 256, 256
          %668 = vsyncadd %s659, %s667
          %s669 = smul.addr %s30, 2
          %s670 = smul.addr %s669, 128
          %s671 = scalar_lea.hbm %s6, %s670
          %s673 = sshll.u32 %s662, 4
          %s674 = int_to_ptr.vmem [resolvable:$true] %s673
          %676 = dma.vmem_to_hbm [thread:$0]  %s674, 256, %s671, %s659
        $region80: #{tpu_custom_call.1} parent=43 // pred_fallthru
          _
      $region44: #{tpu_custom_call.1} parent=5 // pred_fallthru
        _
      %p677 = scmp.le.s32.totalorder 2, %s21
      // Predicated region
      $region81: #{tpu_custom_call.1} parent=5 // pred_check
        %p678 = pneg %p677
      $region82: #{tpu_custom_call.1} parent=5 // pred_check_branch
        %680 = sbr.rel (%p678) target = $region84
      $region83: #{tpu_custom_call.1} parent=5 // pred_region
        %s681 = ssub.s32 %s21, 2
        // Predicated region
        $region85: #{tpu_custom_call.1} parent=83 // pred_check
          %p682 = pneg %p200
        $region86: #{tpu_custom_call.1} parent=83 // pred_check_branch
          %684 = sbr.rel (%p682) target = $region88
        $region87: #{tpu_custom_call.1} parent=83 // pred_region
          %s685 = sand.u32 %s185, 1
          %s686 = scalar_lea.sflag [#allocation5], %s685
          %s687 = sand.u32 %s185, 1
          %s688 = smul.addr %s687, 16
          %s689 = scalar_lea.vmem [#allocation14], %s688
          %690 = dma.done %s686, 256
        $region88: #{tpu_custom_call.1} parent=83 // pred_fallthru
          _
      $region84: #{tpu_custom_call.1} parent=5 // pred_fallthru
        _
    $region6: #{tpu_custom_call.1} parent=1 // loop_footer
      %s25 = sadd.s32 1, %s21
    $region7: #{tpu_custom_call.1} parent=1 // loop_footer_branch
      %20 = sbr.rel target = $region3
    $region8: #{tpu_custom_call.1} parent=1 // loop_exit
      _
    %691 = vsyncpa [#allocation4], 1
    %s692 = scalar_lea.sflag [#allocation4], 1
    %693 = vsyncpa %s692, 1
    %694 = vsyncpa [#allocation7], 1
    %695 = vsyncpa [#allocation10], 1
    %696 = vsyncpa [#allocation13], 1
    %697 = vsyncpa [#allocation5], 1
    %s698 = scalar_lea.sflag [#allocation5], 1
    %699 = vsyncpa %s698, 1

</llo_original>
